<compile_context>
chip_gen: v7x
topology: tpu7x:2x2x1
jax: 0.10.0
libtpu: 0.0.40
codegen_flags: <defaults>
</compile_context>

<pallas_src>
import jax
import jax.numpy as jnp
from jax import lax
from jax.experimental import pallas as pl
from jax.experimental.pallas import tpu as pltpu


def _round_up(x, m):
    return ((x + m - 1) // m) * m


def _sublane_multiple(dtype):
    itemsize = jnp.dtype(dtype).itemsize
    if itemsize >= 4:
        return 8
    if itemsize == 2:
        return 16
    return 32


def _make_kernel(B, T, tb, tk, nb, nt):
    b_has_pad = nb * tb > B
    t_has_pad = nt * tk > T
    has_boundary = b_has_pad or t_has_pad

    def kernel(inp_ref, seq_ref, rew_ref, num_ref, den_ref,
               acc_num, acc_den, carry):
        b = pl.program_id(0)
        t = pl.program_id(1)

        @pl.when(t == 0)
        def _init():
            acc_num[...] = jnp.zeros_like(acc_num)
            acc_den[...] = jnp.zeros_like(acc_den)

        inp = inp_ref[...].astype(jnp.float32)
        rew = rew_ref[...].astype(jnp.float32)
        m = (seq_ref[...] > 0).astype(jnp.float32)            # (tb, tk)

        # Shifted mask: column 0 of the first T tile is 1; column 0 of later
        # tiles is the carried last (seq > 0) column of the previous tile.
        # Correct only because T is the innermost sequential grid axis.
        shifted = pltpu.roll(m, shift=1, axis=1)               # XLU slot
        first_col = jnp.where(t == 0, jnp.float32(1.0), carry[...])   # (tb, 1)
        local_col = lax.broadcasted_iota(jnp.int32, (tb, tk), 1)
        mask = jnp.where(local_col == 0, first_col, shifted)

        # Carry this tile's last (seq > 0) column to the next T tile.
        carry[...] = m[:, tk - 1:tk]

        def fast_path():
            # Interior tile: no edge masking, per-row lane reduce (XLU),
            # negate folded into the accumulation.
            acc_num[...] -= jnp.sum(inp * rew * mask, axis=1, keepdims=True)
            acc_den[...] += jnp.sum(mask, axis=1, keepdims=True)

        def boundary_path():
            # Last B / last T block: exclude padded rows/cols.  select (not
            # multiply) so NaN/Inf garbage in the padded region cannot poison
            # the accumulator.
            rows = b * tb + lax.broadcasted_iota(jnp.int32, (tb, tk), 0)
            cols = t * tk + local_col
            valid = (rows < B) & (cols < T)
            mb = jnp.where(valid, mask, jnp.float32(0.0))
            vals = jnp.where(mb > 0.0, inp * rew, jnp.float32(0.0))
            acc_num[...] -= jnp.sum(vals, axis=1, keepdims=True)
            acc_den[...] += jnp.sum(mb, axis=1, keepdims=True)

        if has_boundary:
            b_edge = (b == nb - 1) if b_has_pad else False
            t_edge = (t == nt - 1) if t_has_pad else False
            is_boundary = jnp.logical_or(b_edge, t_edge)
            pl.when(jnp.logical_not(is_boundary))(fast_path)
            pl.when(is_boundary)(boundary_path)
        else:
            fast_path()

        @pl.when(t == nt - 1)
        def _finish():
            num_ref[...] = acc_num[...]
            den_ref[...] = acc_den[...]

    return kernel


def reward_criterion(inp, seq, reward, *, tb=256, tk=2048, num_cores=2):
    """sum(-inp * reward * shifted_mask) / sum(shifted_mask) via Pallas.

    inp / reward may be f32 or bf16; seq may be any int dtype (int32/int16/
    int8) -- narrower dtypes cut HBM bytes on this purely bandwidth-bound op.
    """
    B, T = inp.shape
    assert seq.shape == (B, T) and reward.shape == (B, T)

    # Sublane multiple must respect the narrowest dtype's packing:
    # 8 for 32-bit, 16 for bf16, 32 for int8.
    sub = max(_sublane_multiple(inp.dtype),
              _sublane_multiple(seq.dtype),
              _sublane_multiple(reward.dtype))

    # B tiling: keep at least `num_cores` B-blocks whenever B allows it so
    # v7x's two TensorCores both get work (B axis is "parallel").
    tb_full = _round_up(B, sub)
    tb_split = _round_up(pl.cdiv(B, num_cores), sub)
    tb = max(sub, min(tb, tb_full, tb_split))
    tb = _round_up(tb, sub)

    tk = min(tk, _round_up(T, 128))
    tk = _round_up(tk, 128)

    nb = pl.cdiv(B, tb)
    nt = pl.cdiv(T, tk)

    num_parts, den_parts = pl.pallas_call(
        _make_kernel(B, T, tb, tk, nb, nt),
        grid=(nb, nt),   # T (reduction) is innermost: required by the mask carry.
        in_specs=[
            pl.BlockSpec((tb, tk), lambda b, t: (b, t)),   # input (log-probs)
            pl.BlockSpec((tb, tk), lambda b, t: (b, t)),   # seq (token ids)
            pl.BlockSpec((tb, tk), lambda b, t: (b, t)),   # reward
        ],
        out_specs=(
            pl.BlockSpec((tb, 1), lambda b, t: (b, 0)),    # per-row numerator
            pl.BlockSpec((tb, 1), lambda b, t: (b, 0)),    # per-row denominator
        ),
        out_shape=(
            jax.ShapeDtypeStruct((nb * tb, 1), jnp.float32),
            jax.ShapeDtypeStruct((nb * tb, 1), jnp.float32),
        ),
        scratch_shapes=[
            pltpu.VMEM((tb, 1), jnp.float32),   # acc_num (per-row)
            pltpu.VMEM((tb, 1), jnp.float32),   # acc_den (per-row)
            pltpu.VMEM((tb, 1), jnp.float32),   # carried mask column
        ],
        compiler_params=pltpu.CompilerParams(
            dimension_semantics=("parallel", "arbitrary"),
            vmem_limit_bytes=48 * 1024 * 1024,   # safe on v7x (64 MiB physical)
        ),
    )(inp, seq, reward)

    # Padded rows accumulate exactly 0, so summing everything is safe.
    return jnp.sum(num_parts) / jnp.sum(den_parts)


def _reference(inp, seq, reward):
    mask = (seq > 0).astype(jnp.float32)
    mask = jnp.concatenate(
        [jnp.ones((mask.shape[0], 1), jnp.float32), mask[:, :-1]], axis=1)
    out = -inp.astype(jnp.float32) * reward.astype(jnp.float32) * mask
    return jnp.sum(out) / jnp.sum(mask)


if __name__ == "__main__":
    key = jax.random.PRNGKey(0)
    k1, k2, k3 = jax.random.split(key, 3)

    # B not a multiple of 8, T not a multiple of 128: exercises boundary path,
    # B split into >= 2 blocks, and the cross-T-tile mask carry (below).
    B, T = 12, 2000
    inp = -jnp.abs(jax.random.normal(k1, (B, T), dtype=jnp.float32))
    seq = jax.random.randint(k2, (B, T), minval=0, maxval=4, dtype=jnp.int32)
    reward = jax.random.normal(k3, (B, T), dtype=jnp.float32)

    ref = _reference(inp, seq, reward)

    # Default tiles: grid (2, 1) -> B split across blocks + T-tail boundary path.
    out_default = jax.block_until_ready(reward_criterion(inp, seq, reward))
    assert jnp.allclose(out_default, ref, rtol=1e-4, atol=1e-5), (out_default, ref)

    # Forced small tiles: grid (2, 4) -> interior fast path + shifted-mask carry.
    out_small = jax.block_until_ready(
        reward_criterion(inp, seq, reward, tb=8, tk=512))
    assert jnp.allclose(out_small, ref, rtol=1e-4, atol=1e-5), (out_small, ref)

    # Exact-multiple shapes: no boundary tiles at all (pure fast path codegen).
    B2, T2 = 16, 1024
    k4, k5, k6 = jax.random.split(jax.random.PRNGKey(1), 3)
    inp2 = jax.random.normal(k4, (B2, T2), dtype=jnp.float32)
    seq2 = jax.random.randint(k5, (B2, T2), 0, 4, dtype=jnp.int32)
    rew2 = jax.random.normal(k6, (B2, T2), dtype=jnp.float32)
    ref2 = _reference(inp2, seq2, rew2)
    out2 = jax.block_until_ready(reward_criterion(inp2, seq2, rew2))
    assert jnp.allclose(out2, ref2, rtol=1e-4, atol=1e-5), (out2, ref2)

    # Narrow dtypes (bf16 log-probs / rewards): exercises the dtype-aware
    # sublane clamp (tb rounded to a multiple of 16) and the HBM-byte saving
    # path recommended for v5e/v6e.
    inp_bf = inp.astype(jnp.bfloat16)
    rew_bf = reward.astype(jnp.bfloat16)
    ref_bf = _reference(inp_bf, seq, rew_bf)
    out_bf = jax.block_until_ready(reward_criterion(inp_bf, seq, rew_bf))
    assert jnp.allclose(out_bf, ref_bf, rtol=1e-3, atol=1e-4), (out_bf, ref_bf)

    print("KERNEL_OK")
</pallas_src>

<mosaic_0001>
module attributes {stable_mosaic.version = 11 : i64} {
  func.func @kernel(%arg0: i32, %arg1: i32, %arg2: memref<8x2048xf32, #tpu.memory_space<vmem>>, %arg3: memref<8x2048xi32, #tpu.memory_space<vmem>>, %arg4: memref<8x2048xf32, #tpu.memory_space<vmem>>, %arg5: memref<8x1xf32, #tpu.memory_space<vmem>>, %arg6: memref<8x1xf32, #tpu.memory_space<vmem>>, %arg7: memref<8x1xf32, #tpu.memory_space<vmem>>, %arg8: memref<8x1xf32, #tpu.memory_space<vmem>>, %arg9: memref<8x1xf32, #tpu.memory_space<vmem>>) attributes {dimension_semantics = [#tpu.dimension_semantics<parallel>, #tpu.dimension_semantics<arbitrary>], iteration_bounds = array<i64: 2, 1>, scalar_prefetch = 0 : i64, scratch_operands = 3 : i64, tpu.core_type = #tpu.core_type<tc>, window_params = [{transform_indices = @transform_0, window_bounds = array<i64: 8, 2048>}, {transform_indices = @transform_1, window_bounds = array<i64: 8, 2048>}, {transform_indices = @transform_2, window_bounds = array<i64: 8, 2048>}, {transform_indices = @transform_3, window_bounds = array<i64: 8, 1>}, {transform_indices = @transform_4, window_bounds = array<i64: 8, 1>}]} {
    %c0_i32 = arith.constant 0 : i32
    %0 = arith.cmpi eq, %arg1, %c0_i32 : i32
    %1 = arith.extui %0 : i1 to i32
    %c0_i32_0 = arith.constant 0 : i32
    %2 = arith.cmpi ne, %1, %c0_i32_0 : i32
    scf.if %2 {
      %cst_19 = arith.constant 0.000000e+00 : f32
      %34 = vector.broadcast %cst_19 : f32 to vector<8x1xf32>
      %c0_20 = arith.constant 0 : index
      %c0_21 = arith.constant 0 : index
      %35 = vector.load %arg7[%c0_20, %c0_21] : memref<8x1xf32, #tpu.memory_space<vmem>>, vector<8x1xf32>
      tpu.vector_store %arg7[%c0_20, %c0_21], %34 {strides = array<i32>} : memref<8x1xf32, #tpu.memory_space<vmem>>, vector<8x1xf32>,
      %cst_22 = arith.constant 0.000000e+00 : f32
      %36 = vector.broadcast %cst_22 : f32 to vector<8x1xf32>
      %c0_23 = arith.constant 0 : index
      %c0_24 = arith.constant 0 : index
      %37 = vector.load %arg8[%c0_23, %c0_24] : memref<8x1xf32, #tpu.memory_space<vmem>>, vector<8x1xf32>
      tpu.vector_store %arg8[%c0_23, %c0_24], %36 {strides = array<i32>} : memref<8x1xf32, #tpu.memory_space<vmem>>, vector<8x1xf32>,
    } else {
    }
    %c0 = arith.constant 0 : index
    %c0_1 = arith.constant 0 : index
    %3 = vector.load %arg2[%c0, %c0_1] : memref<8x2048xf32, #tpu.memory_space<vmem>>, vector<8x2048xf32>
    %c0_2 = arith.constant 0 : index
    %c0_3 = arith.constant 0 : index
    %4 = vector.load %arg4[%c0_2, %c0_3] : memref<8x2048xf32, #tpu.memory_space<vmem>>, vector<8x2048xf32>
    %c0_4 = arith.constant 0 : index
    %c0_5 = arith.constant 0 : index
    %5 = vector.load %arg3[%c0_4, %c0_5] : memref<8x2048xi32, #tpu.memory_space<vmem>>, vector<8x2048xi32>
    %c0_i32_6 = arith.constant 0 : i32
    %6 = vector.broadcast %c0_i32_6 : i32 to vector<8x2048xi32>
    %7 = arith.cmpi sgt, %5, %6 : vector<8x2048xi32>
    %8 = arith.extui %7 : vector<8x2048xi1> to vector<8x2048xi32>
    %9 = arith.sitofp %8 : vector<8x2048xi32> to vector<8x2048xf32>
    %c1_i32 = arith.constant 1 : i32
    %10 = tpu.dynamic_rotate %9 by %c1_i32 dim 1 : vector<8x2048xf32>, i32 -> vector<8x2048xf32>
    %c0_i32_7 = arith.constant 0 : i32
    %11 = arith.cmpi eq, %arg1, %c0_i32_7 : i32
    %c0_8 = arith.constant 0 : index
    %c0_9 = arith.constant 0 : index
    %12 = vector.load %arg9[%c0_8, %c0_9] : memref<8x1xf32, #tpu.memory_space<vmem>>, vector<8x1xf32>
    %cst = arith.constant 1.000000e+00 : f32
    %13 = vector.broadcast %cst : f32 to vector<8x1xf32>
    %14 = arith.select %11, %13, %12 : vector<8x1xf32>
    %15 = tpu.iota {dimensions = array<i32: 1>} : vector<8x2048xi32>
    %c0_i32_10 = arith.constant 0 : i32
    %16 = vector.broadcast %c0_i32_10 : i32 to vector<8x2048xi32>
    %17 = arith.cmpi eq, %15, %16 : vector<8x2048xi32>
    %18 = vector.shape_cast %14 : vector<8x1xf32> to vector<8x1xf32>
    %19 = vector.broadcast %18 : vector<8x1xf32> to vector<8x2048xf32>
    %20 = arith.select %17, %19, %10 : vector<8x2048xi1>, vector<8x2048xf32>
    %21 = vector.extract_strided_slice %9 {offsets = [0, 2047], sizes = [8, 1], strides = [1, 1]} : vector<8x2048xf32> to vector<8x1xf32>
    %c0_11 = arith.constant 0 : index
    %c0_12 = arith.constant 0 : index
    %22 = vector.load %arg9[%c0_11, %c0_12] : memref<8x1xf32, #tpu.memory_space<vmem>>, vector<8x1xf32>
    tpu.vector_store %arg9[%c0_11, %c0_12], %21 {strides = array<i32>} : memref<8x1xf32, #tpu.memory_space<vmem>>, vector<8x1xf32>,
    %c1_i32_13 = arith.constant 1 : i32
    %23 = arith.cmpi eq, %arg0, %c1_i32_13 : i32
    %c0_i32_14 = arith.constant 0 : i32
    %24 = arith.cmpi eq, %arg1, %c0_i32_14 : i32
    %25 = arith.ori %23, %24 : i1
    %true = arith.constant true
    %26 = arith.xori %25, %true : i1
    %27 = arith.extui %26 : i1 to i32
    %c0_i32_15 = arith.constant 0 : i32
    %28 = arith.cmpi ne, %27, %c0_i32_15 : i32
    scf.if %28 {
      %c0_19 = arith.constant 0 : index
      %c0_20 = arith.constant 0 : index
      %34 = vector.load %arg7[%c0_19, %c0_20] : memref<8x1xf32, #tpu.memory_space<vmem>>, vector<8x1xf32>
      %35 = arith.mulf %3, %4 : vector<8x2048xf32>
      %36 = arith.mulf %35, %20 : vector<8x2048xf32>
      %cst_21 = arith.constant dense<0.000000e+00> : vector<8xf32>
      %37 = vector.multi_reduction <add>, %36, %cst_21 [1] : vector<8x2048xf32> to vector<8xf32>
      %38 = vector.shape_cast %37 : vector<8xf32> to vector<8x1xf32>
      %39 = arith.subf %34, %38 : vector<8x1xf32>
      %c0_22 = arith.constant 0 : index
      %c0_23 = arith.constant 0 : index
      %40 = vector.load %arg7[%c0_22, %c0_23] : memref<8x1xf32, #tpu.memory_space<vmem>>, vector<8x1xf32>
      tpu.vector_store %arg7[%c0_22, %c0_23], %39 {strides = array<i32>} : memref<8x1xf32, #tpu.memory_space<vmem>>, vector<8x1xf32>,
      %c0_24 = arith.constant 0 : index
      %c0_25 = arith.constant 0 : index
      %41 = vector.load %arg8[%c0_24, %c0_25] : memref<8x1xf32, #tpu.memory_space<vmem>>, vector<8x1xf32>
      %cst_26 = arith.constant dense<0.000000e+00> : vector<8xf32>
      %42 = vector.multi_reduction <add>, %20, %cst_26 [1] : vector<8x2048xf32> to vector<8xf32>
      %43 = vector.shape_cast %42 : vector<8xf32> to vector<8x1xf32>
      %44 = arith.addf %41, %43 : vector<8x1xf32>
      %c0_27 = arith.constant 0 : index
      %c0_28 = arith.constant 0 : index
      %45 = vector.load %arg8[%c0_27, %c0_28] : memref<8x1xf32, #tpu.memory_space<vmem>>, vector<8x1xf32>
      tpu.vector_store %arg8[%c0_27, %c0_28], %44 {strides = array<i32>} : memref<8x1xf32, #tpu.memory_space<vmem>>, vector<8x1xf32>,
    } else {
    }
    %29 = arith.extui %25 : i1 to i32
    %c0_i32_16 = arith.constant 0 : i32
    %30 = arith.cmpi ne, %29, %c0_i32_16 : i32
    scf.if %30 {
      %c8_i32 = arith.constant 8 : i32
      %34 = arith.muli %arg0, %c8_i32 : i32
      %35 = tpu.iota {dimensions = array<i32: 0>} : vector<8x2048xi32>
      %36 = vector.broadcast %34 : i32 to vector<8x2048xi32>
      %37 = arith.addi %36, %35 : vector<8x2048xi32>
      %c2048_i32 = arith.constant 2048 : i32
      %38 = arith.muli %arg1, %c2048_i32 : i32
      %39 = vector.broadcast %38 : i32 to vector<8x2048xi32>
      %40 = arith.addi %39, %15 : vector<8x2048xi32>
      %c12_i32 = arith.constant 12 : i32
      %41 = vector.broadcast %c12_i32 : i32 to vector<8x2048xi32>
      %42 = arith.cmpi slt, %37, %41 : vector<8x2048xi32>
      %c2000_i32 = arith.constant 2000 : i32
      %43 = vector.broadcast %c2000_i32 : i32 to vector<8x2048xi32>
      %44 = arith.cmpi slt, %40, %43 : vector<8x2048xi32>
      %45 = arith.andi %42, %44 : vector<8x2048xi1>
      %cst_19 = arith.constant 0.000000e+00 : f32
      %46 = vector.broadcast %cst_19 : f32 to vector<8x2048xf32>
      %47 = arith.select %45, %20, %46 : vector<8x2048xi1>, vector<8x2048xf32>
      %cst_20 = arith.constant 0.000000e+00 : f32
      %48 = vector.broadcast %cst_20 : f32 to vector<8x2048xf32>
      %49 = arith.cmpf ogt, %47, %48 : vector<8x2048xf32>
      %50 = arith.mulf %3, %4 : vector<8x2048xf32>
      %cst_21 = arith.constant 0.000000e+00 : f32
      %51 = vector.broadcast %cst_21 : f32 to vector<8x2048xf32>
      %52 = arith.select %49, %50, %51 : vector<8x2048xi1>, vector<8x2048xf32>
      %c0_22 = arith.constant 0 : index
      %c0_23 = arith.constant 0 : index
      %53 = vector.load %arg7[%c0_22, %c0_23] : memref<8x1xf32, #tpu.memory_space<vmem>>, vector<8x1xf32>
      %cst_24 = arith.constant dense<0.000000e+00> : vector<8xf32>
      %54 = vector.multi_reduction <add>, %52, %cst_24 [1] : vector<8x2048xf32> to vector<8xf32>
      %55 = vector.shape_cast %54 : vector<8xf32> to vector<8x1xf32>
      %56 = arith.subf %53, %55 : vector<8x1xf32>
      %c0_25 = arith.constant 0 : index
      %c0_26 = arith.constant 0 : index
      %57 = vector.load %arg7[%c0_25, %c0_26] : memref<8x1xf32, #tpu.memory_space<vmem>>, vector<8x1xf32>
      tpu.vector_store %arg7[%c0_25, %c0_26], %56 {strides = array<i32>} : memref<8x1xf32, #tpu.memory_space<vmem>>, vector<8x1xf32>,
      %c0_27 = arith.constant 0 : index
      %c0_28 = arith.constant 0 : index
      %58 = vector.load %arg8[%c0_27, %c0_28] : memref<8x1xf32, #tpu.memory_space<vmem>>, vector<8x1xf32>
      %cst_29 = arith.constant dense<0.000000e+00> : vector<8xf32>
      %59 = vector.multi_reduction <add>, %47, %cst_29 [1] : vector<8x2048xf32> to vector<8xf32>
      %60 = vector.shape_cast %59 : vector<8xf32> to vector<8x1xf32>
      %61 = arith.addf %58, %60 : vector<8x1xf32>
      %c0_30 = arith.constant 0 : index
      %c0_31 = arith.constant 0 : index
      %62 = vector.load %arg8[%c0_30, %c0_31] : memref<8x1xf32, #tpu.memory_space<vmem>>, vector<8x1xf32>
      tpu.vector_store %arg8[%c0_30, %c0_31], %61 {strides = array<i32>} : memref<8x1xf32, #tpu.memory_space<vmem>>, vector<8x1xf32>,
    } else {
    }
    %c0_i32_17 = arith.constant 0 : i32
    %31 = arith.cmpi eq, %arg1, %c0_i32_17 : i32
    %32 = arith.extui %31 : i1 to i32
    %c0_i32_18 = arith.constant 0 : i32
    %33 = arith.cmpi ne, %32, %c0_i32_18 : i32
    scf.if %33 {
      %c0_19 = arith.constant 0 : index
      %c0_20 = arith.constant 0 : index
      %34 = vector.load %arg7[%c0_19, %c0_20] : memref<8x1xf32, #tpu.memory_space<vmem>>, vector<8x1xf32>
      %c0_21 = arith.constant 0 : index
      %c0_22 = arith.constant 0 : index
      %35 = vector.load %arg5[%c0_21, %c0_22] : memref<8x1xf32, #tpu.memory_space<vmem>>, vector<8x1xf32>
      tpu.vector_store %arg5[%c0_21, %c0_22], %34 {strides = array<i32>} : memref<8x1xf32, #tpu.memory_space<vmem>>, vector<8x1xf32>,
      %c0_23 = arith.constant 0 : index
      %c0_24 = arith.constant 0 : index
      %36 = vector.load %arg8[%c0_23, %c0_24] : memref<8x1xf32, #tpu.memory_space<vmem>>, vector<8x1xf32>
      %c0_25 = arith.constant 0 : index
      %c0_26 = arith.constant 0 : index
      %37 = vector.load %arg6[%c0_25, %c0_26] : memref<8x1xf32, #tpu.memory_space<vmem>>, vector<8x1xf32>
      tpu.vector_store %arg6[%c0_25, %c0_26], %36 {strides = array<i32>} : memref<8x1xf32, #tpu.memory_space<vmem>>, vector<8x1xf32>,
    } else {
    }
    return
  }
  func.func @transform_0(%arg0: i32, %arg1: i32) -> (i32, i32) {
    %c0_i32 = arith.constant 0 : i32
    return %arg0, %arg1 : i32, i32
  }
  func.func @transform_1(%arg0: i32, %arg1: i32) -> (i32, i32) {
    %c0_i32 = arith.constant 0 : i32
    return %arg0, %arg1 : i32, i32
  }
  func.func @transform_2(%arg0: i32, %arg1: i32) -> (i32, i32) {
    %c0_i32 = arith.constant 0 : i32
    return %arg0, %arg1 : i32, i32
  }
  func.func @transform_3(%arg0: i32, %arg1: i32) -> (i32, i32) {
    %c0_i32 = arith.constant 0 : i32
    %c0_i32_0 = arith.constant 0 : i32
    return %arg0, %c0_i32 : i32, i32
  }
  func.func @transform_4(%arg0: i32, %arg1: i32) -> (i32, i32) {
    %c0_i32 = arith.constant 0 : i32
    %c0_i32_0 = arith.constant 0 : i32
    return %arg0, %c0_i32 : i32, i32
  }
}

</mosaic_0001>

<llo_original>
// kernel: tpu_custom_call.1
$region0: #{tpu_custom_call.1}
  #allocation0 [shape = 'u32[]', space=smem, size = 0x4, offset = 0x4, fixed_abs, tag = 'smem constant byte address 0x4 - core index']
  #allocation1 [shape = 'u32[144,128]{1,0:T(1,128)}', space=vmem, size = 0x12000, scoped, tag = 'internal scratch']
  #allocation2 [shape = 'f32[8,1]{1,0:T(8,128)}', space=vmem, size = 0x1000, scoped, tag = 'scratch operand']
  #allocation3 [shape = 'f32[8,1]{1,0:T(8,128)}', space=vmem, size = 0x1000, scoped, tag = 'scratch operand']
  #allocation4 [shape = 'f32[8,1]{1,0:T(8,128)}', space=vmem, size = 0x1000, scoped, tag = 'scratch operand']
  %s0 = inlined_call_operand.hbm [shape: f32[12,2000], index: 0, kind: input, shape index: {}]
  %s1 = inlined_call_operand.hbm [shape: s32[12,2000], index: 1, kind: input, shape index: {}]
  %s2 = inlined_call_operand.hbm [shape: f32[12,2000], index: 2, kind: input, shape index: {}]
  %s3 = inlined_call_operand.vmem [shape: f32[16,1], index: 3, kind: output, shape index: {0}]
  %s4 = inlined_call_operand.vmem [shape: f32[16,1], index: 4, kind: output, shape index: {1}]
  %5 = xla_tuple %s3, %s4
  %s6 = sld [smem:[#allocation0]]
  $region81: #{tpu_custom_call.1} parent=0
    _
  %s8 = ssub.s32 1, %s6
  %s9 = scalar_select 0, %s8, %s6
  $region1: #{tpu_custom_call.1} parent=0
    #allocation5 [shape = 'u8[131072]{0}', space=vmem, size = 0x20000, scoped, tag = 'input window, operand 0']
    #allocation6 [shape = 's32[2]{0}', space=sflag, size = 0x8, scoped, tag = 'scoped memory for tpu_custom_call.1']
    #allocation7 [shape = 'u8[131072]{0}', space=vmem, size = 0x20000, scoped, tag = 'input window, operand 1']
    #allocation8 [shape = 's32[2]{0}', space=sflag, size = 0x8, scoped, tag = 'scoped memory for tpu_custom_call.1']
    #allocation9 [shape = 'u8[131072]{0}', space=vmem, size = 0x20000, scoped, tag = 'input window, operand 2']
    %10 = vsyncpa [#allocation6], 0
    %s11 = scalar_lea.sflag [#allocation6], 1
    %12 = vsyncpa %s11, 0
    %13 = vsyncpa [#allocation8], 0
    %s14 = scalar_lea.sflag [#allocation8], 1
    %15 = vsyncpa %s14, 0
    loop: start=0, step=1, limit=4
    $region2: #{tpu_custom_call.1} parent=1 // loop_pre_header
      _
    $region3: #{tpu_custom_call.1} parent=1 // loop_header
      %s17 = sphi 0, %s21
      %p18 = scmp.ge.s32.totalorder %s17, 4
      %s24 = sphi 0, %s36
      %s25 = sphi 0, %s32
      %s26 = sphi 0, %s24
      %s27 = sphi 0, %s25
      %s28 = sphi 0, %s26
      %s29 = sphi 0, %s27
      %s41 = sphi 0, %s43
      %s44 = sphi 0, %s41
      %s45 = sphi 0, %s44
      %s61 = sphi 0, %s45
      %s69 = sphi 0, %s71
      %s72 = sphi 0, %s69
      %s73 = sphi 0, %s72
      %s89 = sphi 0, %s73
      %s97 = sphi 0, %s99
      %s100 = sphi 0, %s97
      %s101 = sphi 0, %s100
      %s117 = sphi 0, %s101
      %s123 = sphi 0, %s125
      %s126 = sphi 0, %s123
      %s127 = sphi 0, %s126
      %s143 = sphi 0, %s127
      %s149 = sphi 0, %s151
      %s152 = sphi 0, %s149
      %s153 = sphi 0, %s152
      %s169 = sphi 0, %s153
    $region4: #{tpu_custom_call.1} parent=1 // loop_header_branch
      %20 = sbr.rel (%p18) target = $region8
    $region5: #{tpu_custom_call.1} parent=1 // loop_body
      %s22 = ssub.s32 %s17, 1
      %s23 = ssub.s32 %s17, 2
      %s30 = sadd.s32 1, %s25
      %p31 = scmp.ge.s32.totalorder %s30, 1
      %s32 = scalar_select %p31, 0, %s30
      %s33 = sadd.s32 1, %s24
      %s34 = scalar_select %p31, %s33, %s24
      %p35 = scmp.ge.s32.totalorder %s34, 2
      %s36 = scalar_select %p35, 0, %s34
      %s37 = ssub.s32 %s24, %s36
      %s38 = ssub.s32 %s25, %s32
      %s39 = sor.u32 %s37, %s38
      %p40 = scmp.eq.s32.totalorder %s39, 0
      %s42 = sadd.s32 %s41, 1
      %s43 = scalar_select %p40, %s41, %s42
      %p46 = pneg %p40
      %p47 = scmp.eq.s32.totalorder %s17, 1
      %p48 = por %p46, %p47
      %p49 = scmp.ne.s32.totalorder %s41, %s44
      %p50 = scmp.eq.s32.totalorder %s17, 0
      %p51 = por %p49, %p50
      %p52 = scmp.ne.s32.totalorder %s41, %s44
      %p53 = scmp.eq.s32.totalorder %s22, 1
      %p54 = por %p52, %p53
      %p55 = scmp.ne.s32.totalorder %s44, %s45
      %p56 = scmp.eq.s32.totalorder %s22, 0
      %p57 = por %p55, %p56
      %p58 = scmp.ne.s32.totalorder %s44, %s45
      %p59 = scmp.eq.s32.totalorder %s23, 1
      %p60 = por %p58, %p59
      %p62 = scmp.ne.s32.totalorder %s45, %s61
      %p63 = scmp.eq.s32.totalorder %s23, 0
      %p64 = por %p62, %p63
      %s65 = ssub.s32 %s24, %s36
      %s66 = ssub.s32 %s25, %s32
      %s67 = sor.u32 %s65, %s66
      %p68 = scmp.eq.s32.totalorder %s67, 0
      %s70 = sadd.s32 %s69, 1
      %s71 = scalar_select %p68, %s69, %s70
      %p74 = pneg %p68
      %p75 = scmp.eq.s32.totalorder %s17, 1
      %p76 = por %p74, %p75
      %p77 = scmp.ne.s32.totalorder %s69, %s72
      %p78 = scmp.eq.s32.totalorder %s17, 0
      %p79 = por %p77, %p78
      %p80 = scmp.ne.s32.totalorder %s69, %s72
      %p81 = scmp.eq.s32.totalorder %s22, 1
      %p82 = por %p80, %p81
      %p83 = scmp.ne.s32.totalorder %s72, %s73
      %p84 = scmp.eq.s32.totalorder %s22, 0
      %p85 = por %p83, %p84
      %p86 = scmp.ne.s32.totalorder %s72, %s73
      %p87 = scmp.eq.s32.totalorder %s23, 1
      %p88 = por %p86, %p87
      %p90 = scmp.ne.s32.totalorder %s73, %s89
      %p91 = scmp.eq.s32.totalorder %s23, 0
      %p92 = por %p90, %p91
      %s93 = ssub.s32 %s24, %s36
      %s94 = ssub.s32 %s25, %s32
      %s95 = sor.u32 %s93, %s94
      %p96 = scmp.eq.s32.totalorder %s95, 0
      %s98 = sadd.s32 %s97, 1
      %s99 = scalar_select %p96, %s97, %s98
      %p102 = pneg %p96
      %p103 = scmp.eq.s32.totalorder %s17, 1
      %p104 = por %p102, %p103
      %p105 = scmp.ne.s32.totalorder %s97, %s100
      %p106 = scmp.eq.s32.totalorder %s17, 0
      %p107 = por %p105, %p106
      %p108 = scmp.ne.s32.totalorder %s97, %s100
      %p109 = scmp.eq.s32.totalorder %s22, 1
      %p110 = por %p108, %p109
      %p111 = scmp.ne.s32.totalorder %s100, %s101
      %p112 = scmp.eq.s32.totalorder %s22, 0
      %p113 = por %p111, %p112
      %p114 = scmp.ne.s32.totalorder %s100, %s101
      %p115 = scmp.eq.s32.totalorder %s23, 1
      %p116 = por %p114, %p115
      %p118 = scmp.ne.s32.totalorder %s101, %s117
      %p119 = scmp.eq.s32.totalorder %s23, 0
      %p120 = por %p118, %p119
      %s121 = ssub.s32 %s24, %s36
      %p122 = scmp.eq.s32.totalorder %s121, 0
      %s124 = sadd.s32 %s123, 1
      %s125 = scalar_select %p122, %s123, %s124
      %p128 = pneg %p122
      %p129 = scmp.eq.s32.totalorder %s17, 1
      %p130 = por %p128, %p129
      %p131 = scmp.ne.s32.totalorder %s123, %s126
      %p132 = scmp.eq.s32.totalorder %s17, 0
      %p133 = por %p131, %p132
      %p134 = scmp.ne.s32.totalorder %s123, %s126
      %p135 = scmp.eq.s32.totalorder %s22, 1
      %p136 = por %p134, %p135
      %p137 = scmp.ne.s32.totalorder %s126, %s127
      %p138 = scmp.eq.s32.totalorder %s22, 0
      %p139 = por %p137, %p138
      %p140 = scmp.ne.s32.totalorder %s126, %s127
      %p141 = scmp.eq.s32.totalorder %s23, 1
      %p142 = por %p140, %p141
      %p144 = scmp.ne.s32.totalorder %s127, %s143
      %p145 = scmp.eq.s32.totalorder %s23, 0
      %p146 = por %p144, %p145
      %s147 = ssub.s32 %s24, %s36
      %p148 = scmp.eq.s32.totalorder %s147, 0
      %s150 = sadd.s32 %s149, 1
      %s151 = scalar_select %p148, %s149, %s150
      %p154 = pneg %p148
      %p155 = scmp.eq.s32.totalorder %s17, 1
      %p156 = por %p154, %p155
      %p157 = scmp.ne.s32.totalorder %s149, %s152
      %p158 = scmp.eq.s32.totalorder %s17, 0
      %p159 = por %p157, %p158
      %p160 = scmp.ne.s32.totalorder %s149, %s152
      %p161 = scmp.eq.s32.totalorder %s22, 1
      %p162 = por %p160, %p161
      %p163 = scmp.ne.s32.totalorder %s152, %s153
      %p164 = scmp.eq.s32.totalorder %s22, 0
      %p165 = por %p163, %p164
      %p166 = scmp.ne.s32.totalorder %s152, %s153
      %p167 = scmp.eq.s32.totalorder %s23, 1
      %p168 = por %p166, %p167
      %p170 = scmp.ne.s32.totalorder %s153, %s169
      %p171 = scmp.eq.s32.totalorder %s23, 0
      %p172 = por %p170, %p171
      %p173 = scmp.le.s32.totalorder 1, %s17
      %p174 = scmp.lt.s32.totalorder %s17, 3
      %p175 = pnand %p173, %p174
      %p176 = pneg %p175
      // Predicated region
      $region9: #{tpu_custom_call.1} parent=5 // pred_check
        _
      $region10: #{tpu_custom_call.1} parent=5 // pred_check_branch
        %178 = sbr.rel (%p175) target = $region12
      $region11: #{tpu_custom_call.1} parent=5 // pred_region
        %s179 = ssub.s32 %s17, 1
      $region12: #{tpu_custom_call.1} parent=5 // pred_fallthru
        _
      %p180 = scmp.lt.s32.totalorder %s17, 2
      // Predicated region
      $region13: #{tpu_custom_call.1} parent=5 // pred_check
        %p181 = pneg %p180
      $region14: #{tpu_custom_call.1} parent=5 // pred_check_branch
        %183 = sbr.rel (%p181) target = $region16
      $region15: #{tpu_custom_call.1} parent=5 // pred_region
        // Predicated region
        $region17: #{tpu_custom_call.1} parent=15 // pred_check
          %p184 = pneg %p51
        $region18: #{tpu_custom_call.1} parent=15 // pred_check_branch
          %186 = sbr.rel (%p184) target = $region20
        $region19: #{tpu_custom_call.1} parent=15 // pred_region
          %s187 = sand.u32 %s41, 1
          %s188 = scalar_lea.sflag [#allocation6], %s187
          %s189 = sand.u32 %s41, 1
          %s190 = smul.addr %s189, 128
          %s191 = scalar_lea.vmem [#allocation5], %s190
          %s192 = smul.u32 16, %s25
          %s194 = ssub.s32 2048, 2048
          %195 = vsyncadd %s188, %s194
          %s196 = smul.addr %s24, 16
          %s197 = sadd.s32 %s192, %s196
          %s198 = smul.addr %s197, 128
          %s199 = scalar_lea.hbm %s0, %s198
          %s201 = sshll.u32 %s191, 4
          %s202 = int_to_ptr.vmem [resolvable:$true] %s201
          %204 = dma.hbm_to_vmem [thread:$0]  %s199, 2048, %s202, %s188
        $region20: #{tpu_custom_call.1} parent=15 // pred_fallthru
          _
        // Predicated region
        $region21: #{tpu_custom_call.1} parent=15 // pred_check
          %p205 = pneg %p79
        $region22: #{tpu_custom_call.1} parent=15 // pred_check_branch
          %207 = sbr.rel (%p205) target = $region24
        $region23: #{tpu_custom_call.1} parent=15 // pred_region
          %s208 = sand.u32 %s17, 1
          %s209 = scalar_lea.sflag [#allocation8], %s208
          %s210 = sand.u32 %s69, 1
          %s211 = smul.addr %s210, 128
          %s212 = scalar_lea.vmem [#allocation7], %s211
          %s213 = smul.u32 16, %s25
          %s215 = ssub.s32 2048, 2048
          %216 = vsyncadd %s209, %s215
          %s217 = smul.addr %s24, 16
          %s218 = sadd.s32 %s213, %s217
          %s219 = smul.addr %s218, 128
          %s220 = scalar_lea.hbm %s1, %s219
          %s222 = sshll.u32 %s212, 4
          %s223 = int_to_ptr.vmem [resolvable:$true] %s222
          %225 = dma.hbm_to_vmem [thread:$0]  %s220, 2048, %s223, %s209
        $region24: #{tpu_custom_call.1} parent=15 // pred_fallthru
          _
        // Predicated region
        $region25: #{tpu_custom_call.1} parent=15 // pred_check
          %p226 = pneg %p107
        $region26: #{tpu_custom_call.1} parent=15 // pred_check_branch
          %228 = sbr.rel (%p226) target = $region28
        $region27: #{tpu_custom_call.1} parent=15 // pred_region
          %s229 = sand.u32 %s17, 1
          %s230 = scalar_lea.sflag [#allocation8], %s229
          %s231 = sand.u32 %s97, 1
          %s232 = smul.addr %s231, 128
          %s233 = scalar_lea.vmem [#allocation9], %s232
          %s234 = smul.u32 16, %s25
          %s236 = ssub.s32 2048, 2048
          %237 = vsyncadd %s230, %s236
          %s238 = smul.addr %s24, 16
          %s239 = sadd.s32 %s234, %s238
          %s240 = smul.addr %s239, 128
          %s241 = scalar_lea.hbm %s2, %s240
          %s243 = sshll.u32 %s233, 4
          %s244 = int_to_ptr.vmem [resolvable:$true] %s243
          %246 = dma.hbm_to_vmem [thread:$0]  %s241, 2048, %s244, %s230
        $region28: #{tpu_custom_call.1} parent=15 // pred_fallthru
          _
      $region16: #{tpu_custom_call.1} parent=5 // pred_fallthru
        _
      %p247 = scmp.le.s32.totalorder 1, %s17
      %p248 = scmp.lt.s32.totalorder %s17, 3
      %p249 = pnand %p247, %p248
      %p250 = pneg %p249
      // Predicated region
      $region29: #{tpu_custom_call.1} parent=5 // pred_check
        _
      $region30: #{tpu_custom_call.1} parent=5 // pred_check_branch
        %252 = sbr.rel (%p249) target = $region32
      $region31: #{tpu_custom_call.1} parent=5 // pred_region
        %s253 = ssub.s32 %s17, 1
        %s254 = sand.u32 %s44, 1
        %s255 = scalar_lea.sflag [#allocation6], %s254
        %s256 = sand.u32 %s44, 1
        %s257 = smul.addr %s256, 128
        %s258 = scalar_lea.vmem [#allocation5], %s257
        // Predicated region
        $region33: #{tpu_custom_call.1} parent=31 // pred_check
          %p259 = pneg %p57
        $region34: #{tpu_custom_call.1} parent=31 // pred_check_branch
          %261 = sbr.rel (%p259) target = $region36
        $region35: #{tpu_custom_call.1} parent=31 // pred_region
          %262 = dma.done %s255, 2048
        $region36: #{tpu_custom_call.1} parent=31 // pred_fallthru
          _
        %s263 = sand.u32 %s22, 1
        %s264 = scalar_lea.sflag [#allocation8], %s263
        %s265 = sand.u32 %s72, 1
        %s266 = smul.addr %s265, 128
        %s267 = scalar_lea.vmem [#allocation7], %s266
        // Predicated region
        $region37: #{tpu_custom_call.1} parent=31 // pred_check
          %p268 = pneg %p85
        $region38: #{tpu_custom_call.1} parent=31 // pred_check_branch
          %270 = sbr.rel (%p268) target = $region40
        $region39: #{tpu_custom_call.1} parent=31 // pred_region
          %271 = dma.done %s264, 2048
        $region40: #{tpu_custom_call.1} parent=31 // pred_fallthru
          _
        %s272 = sand.u32 %s22, 1
        %s273 = scalar_lea.sflag [#allocation8], %s272
        %s274 = sand.u32 %s100, 1
        %s275 = smul.addr %s274, 128
        %s276 = scalar_lea.vmem [#allocation9], %s275
        // Predicated region
        $region41: #{tpu_custom_call.1} parent=31 // pred_check
          %p277 = pneg %p113
        $region42: #{tpu_custom_call.1} parent=31 // pred_check_branch
          %279 = sbr.rel (%p277) target = $region44
        $region43: #{tpu_custom_call.1} parent=31 // pred_region
          %280 = dma.done %s273, 2048
        $region44: #{tpu_custom_call.1} parent=31 // pred_fallthru
          _
        %s281 = sand.u32 %s44, 1
        %s282 = scalar_lea.sflag [#allocation6], %s281
        %s283 = sand.u32 %s44, 1
        %s284 = smul.addr %s283, 128
        %s285 = scalar_lea.vmem [#allocation5], %s284
        %p286 = pneg %p57
        %p287 = pneg %p54
        %s288 = sand.u32 %s22, 1
        %s289 = scalar_lea.sflag [#allocation8], %s288
        %s290 = sand.u32 %s72, 1
        %s291 = smul.addr %s290, 128
        %s292 = scalar_lea.vmem [#allocation7], %s291
        %p293 = pneg %p85
        %p294 = pneg %p82
        %s295 = sand.u32 %s22, 1
        %s296 = scalar_lea.sflag [#allocation8], %s295
        %s297 = sand.u32 %s100, 1
        %s298 = smul.addr %s297, 128
        %s299 = scalar_lea.vmem [#allocation9], %s298
        %p300 = pneg %p113
        %p301 = pneg %p110
        %p302 = pneg %p139
        %p303 = pneg %p136
        %p304 = scmp.lt.s32.totalorder %s26, 1
        %s305 = scalar_select %p304, %s26, 1
        %s306 = smul.addr %s305, 8
        %s307 = scalar_lea.vmem %s3, %s306
        %p308 = pneg %p165
        %p309 = pneg %p162
        %p310 = scmp.lt.s32.totalorder %s26, 1
        %s311 = scalar_select %p310, %s26, 1
        %s312 = smul.addr %s311, 8
        %s313 = scalar_lea.vmem %s4, %s312
        %s314 = smul.u32 16, %s27
        %s315 = smul.u32 16, %s27
        %s316 = smul.u32 16, %s27
        %p317 = scmp.lt.s32.totalorder %s26, 1
        %s318 = scalar_select %p317, %s26, 1
        %s319 = smul.addr %s318, 8
        %s320 = scalar_lea.vmem %s3, %s319
        %p321 = scmp.lt.s32.totalorder %s26, 1
        %s322 = scalar_select %p321, %s26, 1
        %s323 = smul.addr %s322, 8
        %s324 = scalar_lea.vmem %s4, %s323
        %p325 = scmp.eq.s32.totalorder %s27, 0
        // Predicated region
        $region45: #{tpu_custom_call.1} parent=31 // pred_check
          %p326 = pneg %p325
        $region46: #{tpu_custom_call.1} parent=31 // pred_check_branch
          %328 = sbr.rel (%p326) target = $region48
        $region47: #{tpu_custom_call.1} parent=31 // pred_region
          %vm329 = vcmask 7168
          %330 = vst.msk [vmem:[#allocation2] sm:$0xff] %vm329, 0.0
          %331 = vst.msk [vmem:[#allocation3] sm:$0xff] %vm329, 0.0
        $region48: #{tpu_custom_call.1} parent=31 // pred_fallthru
          _
        %v332 = vld [vmem:[%s258] sm:$0xff]
        %v333 = vld [vmem:[%s258 + $0x8] sm:$0xff]
        %v334 = vld [vmem:[%s258 + $0x10] sm:$0xff]
        %v335 = vld [vmem:[%s258 + $0x18] sm:$0xff]
        %v336 = vld [vmem:[%s258 + $0x20] sm:$0xff]
        %v337 = vld [vmem:[%s258 + $0x28] sm:$0xff]
        %v338 = vld [vmem:[%s258 + $0x30] sm:$0xff]
        %v339 = vld [vmem:[%s258 + $0x38] sm:$0xff]
        %v340 = vld [vmem:[%s258 + $0x40] sm:$0xff]
        %v341 = vld [vmem:[%s258 + $0x48] sm:$0xff]
        %v342 = vld [vmem:[%s258 + $0x50] sm:$0xff]
        %v343 = vld [vmem:[%s258 + $0x58] sm:$0xff]
        %v344 = vld [vmem:[%s258 + $0x60] sm:$0xff]
        %v345 = vld [vmem:[%s258 + $0x68] sm:$0xff]
        %v346 = vld [vmem:[%s258 + $0x70] sm:$0xff]
        %v347 = vld [vmem:[%s258 + $0x78] sm:$0xff]
        %v348 = vld [vmem:[%s276] sm:$0xff]
        %v349 = vld [vmem:[%s276 + $0x8] sm:$0xff]
        %v350 = vld [vmem:[%s276 + $0x10] sm:$0xff]
        %v351 = vld [vmem:[%s276 + $0x18] sm:$0xff]
        %v352 = vld [vmem:[%s276 + $0x20] sm:$0xff]
        %v353 = vld [vmem:[%s276 + $0x28] sm:$0xff]
        %v354 = vld [vmem:[%s276 + $0x30] sm:$0xff]
        %v355 = vld [vmem:[%s276 + $0x38] sm:$0xff]
        %v356 = vld [vmem:[%s276 + $0x40] sm:$0xff]
        %v357 = vld [vmem:[%s276 + $0x48] sm:$0xff]
        %v358 = vld [vmem:[%s276 + $0x50] sm:$0xff]
        %v359 = vld [vmem:[%s276 + $0x58] sm:$0xff]
        %v360 = vld [vmem:[%s276 + $0x60] sm:$0xff]
        %v361 = vld [vmem:[%s276 + $0x68] sm:$0xff]
        %v362 = vld [vmem:[%s276 + $0x70] sm:$0xff]
        %v363 = vld [vmem:[%s276 + $0x78] sm:$0xff]
        %v364 = vld [vmem:[%s267] sm:$0xff]
        %v365 = vld [vmem:[%s267 + $0x8] sm:$0xff]
        %v366 = vld [vmem:[%s267 + $0x10] sm:$0xff]
        %v367 = vld [vmem:[%s267 + $0x18] sm:$0xff]
        %v368 = vld [vmem:[%s267 + $0x20] sm:$0xff]
        %v369 = vld [vmem:[%s267 + $0x28] sm:$0xff]
        %v370 = vld [vmem:[%s267 + $0x30] sm:$0xff]
        %v371 = vld [vmem:[%s267 + $0x38] sm:$0xff]
        %v372 = vld [vmem:[%s267 + $0x40] sm:$0xff]
        %v373 = vld [vmem:[%s267 + $0x48] sm:$0xff]
        %v374 = vld [vmem:[%s267 + $0x50] sm:$0xff]
        %v375 = vld [vmem:[%s267 + $0x58] sm:$0xff]
        %v376 = vld [vmem:[%s267 + $0x60] sm:$0xff]
        %v377 = vld [vmem:[%s267 + $0x68] sm:$0xff]
        %v378 = vld [vmem:[%s267 + $0x70] sm:$0xff]
        %v379 = vld [vmem:[%s267 + $0x78] sm:$0xff]
        %vm380 = vcmp.gt.s32.totalorder %v364, 0
        %vm381 = vcmp.gt.s32.totalorder %v365, 0
        %vm382 = vcmp.gt.s32.totalorder %v366, 0
        %vm383 = vcmp.gt.s32.totalorder %v367, 0
        %vm384 = vcmp.gt.s32.totalorder %v368, 0
        %vm385 = vcmp.gt.s32.totalorder %v369, 0
        %vm386 = vcmp.gt.s32.totalorder %v370, 0
        %vm387 = vcmp.gt.s32.totalorder %v371, 0
        %vm388 = vcmp.gt.s32.totalorder %v372, 0
        %vm389 = vcmp.gt.s32.totalorder %v373, 0
        %vm390 = vcmp.gt.s32.totalorder %v374, 0
        %vm391 = vcmp.gt.s32.totalorder %v375, 0
        %vm392 = vcmp.gt.s32.totalorder %v376, 0
        %vm393 = vcmp.gt.s32.totalorder %v377, 0
        %vm394 = vcmp.gt.s32.totalorder %v378, 0
        %vm395 = vcmp.gt.s32.totalorder %v379, 0
        %v396 = vsel %vm380, 1, 0
        %v397 = vsel %vm381, 1, 0
        %v398 = vsel %vm382, 1, 0
        %v399 = vsel %vm383, 1, 0
        %v400 = vsel %vm384, 1, 0
        %v401 = vsel %vm385, 1, 0
        %v402 = vsel %vm386, 1, 0
        %v403 = vsel %vm387, 1, 0
        %v404 = vsel %vm388, 1, 0
        %v405 = vsel %vm389, 1, 0
        %v406 = vsel %vm390, 1, 0
        %v407 = vsel %vm391, 1, 0
        %v408 = vsel %vm392, 1, 0
        %v409 = vsel %vm393, 1, 0
        %v410 = vsel %vm394, 1, 0
        %v411 = vsel %vm395, 1, 0
        %v412 = vcvt.s32.f32 %v396
        %v413 = vcvt.s32.f32 %v397
        %v414 = vcvt.s32.f32 %v398
        %v415 = vcvt.s32.f32 %v399
        %v416 = vcvt.s32.f32 %v400
        %v417 = vcvt.s32.f32 %v401
        %v418 = vcvt.s32.f32 %v402
        %v419 = vcvt.s32.f32 %v403
        %v420 = vcvt.s32.f32 %v404
        %v421 = vcvt.s32.f32 %v405
        %v422 = vcvt.s32.f32 %v406
        %v423 = vcvt.s32.f32 %v407
        %v424 = vcvt.s32.f32 %v408
        %v425 = vcvt.s32.f32 %v409
        %v426 = vcvt.s32.f32 %v410
        %v427 = vcvt.s32.f32 %v411
        %428 = vrot.lane.b32.xlu0 %v412, 1
        %v429 = vpop.permute.xlu0 %428
        %430 = vrot.lane.b32.xlu0 %v413, 1
        %v431 = vpop.permute.xlu0 %430
        %432 = vrot.lane.b32.xlu0 %v414, 1
        %v433 = vpop.permute.xlu0 %432
        %434 = vrot.lane.b32.xlu0 %v415, 1
        %v435 = vpop.permute.xlu0 %434
        %436 = vrot.lane.b32.xlu0 %v416, 1
        %v437 = vpop.permute.xlu0 %436
        %438 = vrot.lane.b32.xlu0 %v417, 1
        %v439 = vpop.permute.xlu0 %438
        %440 = vrot.lane.b32.xlu0 %v418, 1
        %v441 = vpop.permute.xlu0 %440
        %442 = vrot.lane.b32.xlu0 %v419, 1
        %v443 = vpop.permute.xlu0 %442
        %444 = vrot.lane.b32.xlu0 %v420, 1
        %v445 = vpop.permute.xlu0 %444
        %446 = vrot.lane.b32.xlu0 %v421, 1
        %v447 = vpop.permute.xlu0 %446
        %448 = vrot.lane.b32.xlu0 %v422, 1
        %v449 = vpop.permute.xlu0 %448
        %450 = vrot.lane.b32.xlu0 %v423, 1
        %v451 = vpop.permute.xlu0 %450
        %452 = vrot.lane.b32.xlu0 %v424, 1
        %v453 = vpop.permute.xlu0 %452
        %454 = vrot.lane.b32.xlu0 %v425, 1
        %v455 = vpop.permute.xlu0 %454
        %456 = vrot.lane.b32.xlu0 %v426, 1
        %v457 = vpop.permute.xlu0 %456
        %458 = vrot.lane.b32.xlu0 %v427, 1
        %v459 = vpop.permute.xlu0 %458
        %v460 = vlaneseq
        %v461 = vand.u32 %v460, 127
        %vm462 = vcmp.lt.s32.totalorder %v461, 1
        %v463 = vsel %vm462, %v457, %v459
        %v464 = vsel %vm462, %v455, %v457
        %v465 = vsel %vm462, %v453, %v455
        %v466 = vsel %vm462, %v451, %v453
        %v467 = vsel %vm462, %v449, %v451
        %v468 = vsel %vm462, %v447, %v449
        %v469 = vsel %vm462, %v445, %v447
        %v470 = vsel %vm462, %v443, %v445
        %v471 = vsel %vm462, %v441, %v443
        %v472 = vsel %vm462, %v439, %v441
        %v473 = vsel %vm462, %v437, %v439
        %v474 = vsel %vm462, %v435, %v437
        %v475 = vsel %vm462, %v433, %v435
        %v476 = vsel %vm462, %v431, %v433
        %v477 = vsel %vm462, %v429, %v431
        %v478 = vsel %vm462, %v459, %v429
        %v479 = vld [vmem:[#allocation4] sm:$0xff]
        %s480 = scalar_select %p325, 1, 0
        %v481 = vstv %s480
        %vm482 = vcmp.eq.s32.totalorder %v481, 1
        %v483 = vsel %vm482, 1.0, %v479
        %v484 = vadd.s32 %v461, 128
        %v485 = vadd.s32 %v461, 256
        %v486 = vadd.s32 %v461, 384
        %v487 = vadd.s32 %v461, 512
        %v488 = vadd.s32 %v461, 640
        %v489 = vadd.s32 %v461, 768
        %v490 = vadd.s32 %v461, 896
        %v491 = vadd.s32 %v461, 1024
        %v492 = vadd.s32 %v461, 1152
        %v493 = vadd.s32 %v461, 1280
        %v494 = vadd.s32 %v461, 1408
        %v495 = vadd.s32 %v461, 1536
        %v496 = vadd.s32 %v461, 1664
        %v497 = vadd.s32 %v461, 1792
        %v498 = vadd.s32 %v461, 1920
        %vm499 = vcmp.eq.s32.totalorder %v461, 0
        %vm500 = vcmp.eq.s32.totalorder %v484, 0
        %vm501 = vcmp.eq.s32.totalorder %v485, 0
        %vm502 = vcmp.eq.s32.totalorder %v486, 0
        %vm503 = vcmp.eq.s32.totalorder %v487, 0
        %vm504 = vcmp.eq.s32.totalorder %v488, 0
        %vm505 = vcmp.eq.s32.totalorder %v489, 0
        %vm506 = vcmp.eq.s32.totalorder %v490, 0
        %vm507 = vcmp.eq.s32.totalorder %v491, 0
        %vm508 = vcmp.eq.s32.totalorder %v492, 0
        %vm509 = vcmp.eq.s32.totalorder %v493, 0
        %vm510 = vcmp.eq.s32.totalorder %v494, 0
        %vm511 = vcmp.eq.s32.totalorder %v495, 0
        %vm512 = vcmp.eq.s32.totalorder %v496, 0
        %vm513 = vcmp.eq.s32.totalorder %v497, 0
        %vm514 = vcmp.eq.s32.totalorder %v498, 0
        %516 = vset.pattern.permute.xlu0 0
        %517 = vperm.xlu0 %516, %v483
        %v518 = vpop.permute.xlu0 %517
        %v520 = vsel %vm499, %v518, %v478
        %v521 = vsel %vm500, %v518, %v477
        %v522 = vsel %vm501, %v518, %v476
        %v523 = vsel %vm502, %v518, %v475
        %v524 = vsel %vm503, %v518, %v474
        %v525 = vsel %vm504, %v518, %v473
        %v526 = vsel %vm505, %v518, %v472
        %v527 = vsel %vm506, %v518, %v471
        %v528 = vsel %vm507, %v518, %v470
        %v529 = vsel %vm508, %v518, %v469
        %v530 = vsel %vm509, %v518, %v468
        %v531 = vsel %vm510, %v518, %v467
        %v532 = vsel %vm511, %v518, %v466
        %v533 = vsel %vm512, %v518, %v465
        %v534 = vsel %vm513, %v518, %v464
        %v535 = vsel %vm514, %v518, %v463
        %537 = vrot.lane.b32.xlu0 %v427, 1
        %v538 = vpop.permute.xlu0 %537
        %vm540 = vcmask 7168
        %541 = vst.msk [vmem:[#allocation4] sm:$0xff] %vm540, %v538
        %p542 = scmp.eq.s32.totalorder %s26, 1
        %p543 = por %p542, %p325
        // Predicated region
        $region49: #{tpu_custom_call.1} parent=31 // pred_check
          %p544 = pneg %p543
        $region50: #{tpu_custom_call.1} parent=31 // pred_check_branch
          %546 = sbr.rel (%p544) target = $region52
        $region51: #{tpu_custom_call.1} parent=31 // pred_region
          %s547 = smul.u32 %s26, 8
          %v548 = vlaneseq
          %v549 = vshrl.u32 %v548, 7
          %v550 = vstv %s547
          %v551 = vadd.s32 %v550, %v549
          %s552 = smul.u32 %s27, 2048
          %v553 = vstv %s552
          %v554 = vadd.s32 %v553, %v461
          %v555 = vadd.s32 %v553, %v484
          %v556 = vadd.s32 %v553, %v485
          %v557 = vadd.s32 %v553, %v486
          %v558 = vadd.s32 %v553, %v487
          %v559 = vadd.s32 %v553, %v488
          %v560 = vadd.s32 %v553, %v489
          %v561 = vadd.s32 %v553, %v490
          %v562 = vadd.s32 %v553, %v491
          %v563 = vadd.s32 %v553, %v492
          %v564 = vadd.s32 %v553, %v493
          %v565 = vadd.s32 %v553, %v494
          %v566 = vadd.s32 %v553, %v495
          %v567 = vadd.s32 %v553, %v496
          %v568 = vadd.s32 %v553, %v497
          %v569 = vadd.s32 %v553, %v498
          %vm570 = vcmp.lt.s32.totalorder %v551, 12
          %vm571 = vcmp.lt.s32.totalorder %v554, 2000
          %vm572 = vcmp.lt.s32.totalorder %v555, 2000
          %vm573 = vcmp.lt.s32.totalorder %v556, 2000
          %vm574 = vcmp.lt.s32.totalorder %v557, 2000
          %vm575 = vcmp.lt.s32.totalorder %v558, 2000
          %vm576 = vcmp.lt.s32.totalorder %v559, 2000
          %vm577 = vcmp.lt.s32.totalorder %v560, 2000
          %vm578 = vcmp.lt.s32.totalorder %v561, 2000
          %vm579 = vcmp.lt.s32.totalorder %v562, 2000
          %vm580 = vcmp.lt.s32.totalorder %v563, 2000
          %vm581 = vcmp.lt.s32.totalorder %v564, 2000
          %vm582 = vcmp.lt.s32.totalorder %v565, 2000
          %vm583 = vcmp.lt.s32.totalorder %v566, 2000
          %vm584 = vcmp.lt.s32.totalorder %v567, 2000
          %vm585 = vcmp.lt.s32.totalorder %v568, 2000
          %vm586 = vcmp.lt.s32.totalorder %v569, 2000
          %vm587 = vmand %vm570, %vm571
          %vm588 = vmand %vm570, %vm572
          %vm589 = vmand %vm570, %vm573
          %vm590 = vmand %vm570, %vm574
          %vm591 = vmand %vm570, %vm575
          %vm592 = vmand %vm570, %vm576
          %vm593 = vmand %vm570, %vm577
          %vm594 = vmand %vm570, %vm578
          %vm595 = vmand %vm570, %vm579
          %vm596 = vmand %vm570, %vm580
          %vm597 = vmand %vm570, %vm581
          %vm598 = vmand %vm570, %vm582
          %vm599 = vmand %vm570, %vm583
          %vm600 = vmand %vm570, %vm584
          %vm601 = vmand %vm570, %vm585
          %vm602 = vmand %vm570, %vm586
          %v603 = vsel %vm587, %v520, 0.0
          %v604 = vsel %vm588, %v521, 0.0
          %v605 = vsel %vm589, %v522, 0.0
          %v606 = vsel %vm590, %v523, 0.0
          %v607 = vsel %vm591, %v524, 0.0
          %v608 = vsel %vm592, %v525, 0.0
          %v609 = vsel %vm593, %v526, 0.0
          %v610 = vsel %vm594, %v527, 0.0
          %v611 = vsel %vm595, %v528, 0.0
          %v612 = vsel %vm596, %v529, 0.0
          %v613 = vsel %vm597, %v530, 0.0
          %v614 = vsel %vm598, %v531, 0.0
          %v615 = vsel %vm599, %v532, 0.0
          %v616 = vsel %vm600, %v533, 0.0
          %v617 = vsel %vm601, %v534, 0.0
          %v618 = vsel %vm602, %v535, 0.0
          %vm619 = vcmp.gt.f32.partialorder %v603, 0.0
          %vm620 = vcmp.gt.f32.partialorder %v604, 0.0
          %vm621 = vcmp.gt.f32.partialorder %v605, 0.0
          %vm622 = vcmp.gt.f32.partialorder %v606, 0.0
          %vm623 = vcmp.gt.f32.partialorder %v607, 0.0
          %vm624 = vcmp.gt.f32.partialorder %v608, 0.0
          %vm625 = vcmp.gt.f32.partialorder %v609, 0.0
          %vm626 = vcmp.gt.f32.partialorder %v610, 0.0
          %vm627 = vcmp.gt.f32.partialorder %v611, 0.0
          %vm628 = vcmp.gt.f32.partialorder %v612, 0.0
          %vm629 = vcmp.gt.f32.partialorder %v613, 0.0
          %vm630 = vcmp.gt.f32.partialorder %v614, 0.0
          %vm631 = vcmp.gt.f32.partialorder %v615, 0.0
          %vm632 = vcmp.gt.f32.partialorder %v616, 0.0
          %vm633 = vcmp.gt.f32.partialorder %v617, 0.0
          %vm634 = vcmp.gt.f32.partialorder %v618, 0.0
          %v635 = vmul.f32 %v332, %v348
          %v636 = vmul.f32 %v333, %v349
          %v637 = vmul.f32 %v334, %v350
          %v638 = vmul.f32 %v335, %v351
          %v639 = vmul.f32 %v336, %v352
          %v640 = vmul.f32 %v337, %v353
          %v641 = vmul.f32 %v338, %v354
          %v642 = vmul.f32 %v339, %v355
          %v643 = vmul.f32 %v340, %v356
          %v644 = vmul.f32 %v341, %v357
          %v645 = vmul.f32 %v342, %v358
          %v646 = vmul.f32 %v343, %v359
          %v647 = vmul.f32 %v344, %v360
          %v648 = vmul.f32 %v345, %v361
          %v649 = vmul.f32 %v346, %v362
          %v650 = vmul.f32 %v347, %v363
          %v651 = vsel %vm619, %v635, 0.0
          %v652 = vsel %vm620, %v636, 0.0
          %v653 = vsel %vm621, %v637, 0.0
          %v654 = vsel %vm622, %v638, 0.0
          %v655 = vsel %vm623, %v639, 0.0
          %v656 = vsel %vm624, %v640, 0.0
          %v657 = vsel %vm625, %v641, 0.0
          %v658 = vsel %vm626, %v642, 0.0
          %v659 = vsel %vm627, %v643, 0.0
          %v660 = vsel %vm628, %v644, 0.0
          %v661 = vsel %vm629, %v645, 0.0
          %v662 = vsel %vm630, %v646, 0.0
          %v663 = vsel %vm631, %v647, 0.0
          %v664 = vsel %vm632, %v648, 0.0
          %v665 = vsel %vm633, %v649, 0.0
          %v666 = vsel %vm634, %v650, 0.0
          %v667 = vld [vmem:[#allocation2] sm:$0xff]
          %v668 = vadd.f32 %v651, %v652
          %v669 = vadd.f32 %v668, %v653
          %v670 = vadd.f32 %v669, %v654
          %v671 = vadd.f32 %v670, %v655
          %v672 = vadd.f32 %v671, %v656
          %v673 = vadd.f32 %v672, %v657
          %v674 = vadd.f32 %v673, %v658
          %v675 = vadd.f32 %v674, %v659
          %v676 = vadd.f32 %v675, %v660
          %v677 = vadd.f32 %v676, %v661
          %v678 = vadd.f32 %v677, %v662
          %v679 = vadd.f32 %v678, %v663
          %v680 = vadd.f32 %v679, %v664
          %v681 = vadd.f32 %v680, %v665
          %v682 = vadd.f32 %v681, %v666
          %683 = vadd.xlane.f32.xlu0 %v682
          %v684 = vpop.xlane.xlu0 %683
          %v685 = vsub.f32 %v667, %v684
          %686 = vst.msk [vmem:[#allocation2] sm:$0xff] %vm540, %v685
          %v687 = vld [vmem:[#allocation3] sm:$0xff]
          %v688 = vadd.f32 %v603, %v604
          %v689 = vadd.f32 %v688, %v605
          %v690 = vadd.f32 %v689, %v606
          %v691 = vadd.f32 %v690, %v607
          %v692 = vadd.f32 %v691, %v608
          %v693 = vadd.f32 %v692, %v609
          %v694 = vadd.f32 %v693, %v610
          %v695 = vadd.f32 %v694, %v611
          %v696 = vadd.f32 %v695, %v612
          %v697 = vadd.f32 %v696, %v613
          %v698 = vadd.f32 %v697, %v614
          %v699 = vadd.f32 %v698, %v615
          %v700 = vadd.f32 %v699, %v616
          %v701 = vadd.f32 %v700, %v617
          %v702 = vadd.f32 %v701, %v618
          %703 = vadd.xlane.f32.xlu0 %v702
          %v704 = vpop.xlane.xlu0 %703
          %v705 = vadd.f32 %v687, %v704
          %706 = vst.msk [vmem:[#allocation3] sm:$0xff] %vm540, %v705
        $region52: #{tpu_custom_call.1} parent=31 // pred_fallthru
          _
        %p707 = pneg %p543
        // Predicated region
        $region53: #{tpu_custom_call.1} parent=31 // pred_check
          _
        $region54: #{tpu_custom_call.1} parent=31 // pred_check_branch
          %709 = sbr.rel (%p543) target = $region56
        $region55: #{tpu_custom_call.1} parent=31 // pred_region
          %v710 = vld [vmem:[#allocation2] sm:$0xff]
          %v711 = vmul.f32 %v332, %v348
          %v712 = vmul.f32 %v333, %v349
          %v713 = vmul.f32 %v334, %v350
          %v714 = vmul.f32 %v335, %v351
          %v715 = vmul.f32 %v336, %v352
          %v716 = vmul.f32 %v337, %v353
          %v717 = vmul.f32 %v338, %v354
          %v718 = vmul.f32 %v339, %v355
          %v719 = vmul.f32 %v340, %v356
          %v720 = vmul.f32 %v341, %v357
          %v721 = vmul.f32 %v342, %v358
          %v722 = vmul.f32 %v343, %v359
          %v723 = vmul.f32 %v344, %v360
          %v724 = vmul.f32 %v345, %v361
          %v725 = vmul.f32 %v346, %v362
          %v726 = vmul.f32 %v347, %v363
          %v727 = vmul.f32 %v711, %v520
          %v728 = vmul.f32 %v712, %v521
          %v729 = vmul.f32 %v713, %v522
          %v730 = vmul.f32 %v714, %v523
          %v731 = vmul.f32 %v715, %v524
          %v732 = vmul.f32 %v716, %v525
          %v733 = vmul.f32 %v717, %v526
          %v734 = vmul.f32 %v718, %v527
          %v735 = vmul.f32 %v719, %v528
          %v736 = vmul.f32 %v720, %v529
          %v737 = vmul.f32 %v721, %v530
          %v738 = vmul.f32 %v722, %v531
          %v739 = vmul.f32 %v723, %v532
          %v740 = vmul.f32 %v724, %v533
          %v741 = vmul.f32 %v725, %v534
          %v742 = vmul.f32 %v726, %v535
          %v743 = vadd.f32 %v727, %v728
          %v744 = vadd.f32 %v743, %v729
          %v745 = vadd.f32 %v744, %v730
          %v746 = vadd.f32 %v745, %v731
          %v747 = vadd.f32 %v746, %v732
          %v748 = vadd.f32 %v747, %v733
          %v749 = vadd.f32 %v748, %v734
          %v750 = vadd.f32 %v749, %v735
          %v751 = vadd.f32 %v750, %v736
          %v752 = vadd.f32 %v751, %v737
          %v753 = vadd.f32 %v752, %v738
          %v754 = vadd.f32 %v753, %v739
          %v755 = vadd.f32 %v754, %v740
          %v756 = vadd.f32 %v755, %v741
          %v757 = vadd.f32 %v756, %v742
          %758 = vadd.xlane.f32.xlu0 %v757
          %v759 = vpop.xlane.xlu0 %758
          %v760 = vsub.f32 %v710, %v759
          %761 = vst.msk [vmem:[#allocation2] sm:$0xff] %vm540, %v760
          %v762 = vld [vmem:[#allocation3] sm:$0xff]
          %v763 = vadd.f32 %v520, %v521
          %v764 = vadd.f32 %v763, %v522
          %v765 = vadd.f32 %v764, %v523
          %v766 = vadd.f32 %v765, %v524
          %v767 = vadd.f32 %v766, %v525
          %v768 = vadd.f32 %v767, %v526
          %v769 = vadd.f32 %v768, %v527
          %v770 = vadd.f32 %v769, %v528
          %v771 = vadd.f32 %v770, %v529
          %v772 = vadd.f32 %v771, %v530
          %v773 = vadd.f32 %v772, %v531
          %v774 = vadd.f32 %v773, %v532
          %v775 = vadd.f32 %v774, %v533
          %v776 = vadd.f32 %v775, %v534
          %v777 = vadd.f32 %v776, %v535
          %778 = vadd.xlane.f32.xlu0 %v777
          %v779 = vpop.xlane.xlu0 %778
          %v780 = vadd.f32 %v762, %v779
          %781 = vst.msk [vmem:[#allocation3] sm:$0xff] %vm540, %v780
        $region56: #{tpu_custom_call.1} parent=31 // pred_fallthru
          _
        // Predicated region
        $region57: #{tpu_custom_call.1} parent=31 // pred_check
          %p782 = pneg %p325
        $region58: #{tpu_custom_call.1} parent=31 // pred_check_branch
          %784 = sbr.rel (%p782) target = $region60
        $region59: #{tpu_custom_call.1} parent=31 // pred_region
          %v785 = vld [vmem:[#allocation2] sm:$0xff]
          %786 = vst.msk [vmem:[%s320] sm:$0xff] %vm540, %v785
          %v787 = vld [vmem:[#allocation3] sm:$0xff]
          %788 = vst.msk [vmem:[%s324] sm:$0xff] %vm540, %v787
        $region60: #{tpu_custom_call.1} parent=31 // pred_fallthru
          _
        %p789 = scmp.lt.s32.totalorder %s26, 1
        %s790 = scalar_select %p789, %s26, 1
        %s791 = smul.addr %s790, 8
        %s792 = scalar_lea.vmem %s3, %s791
        %p793 = scmp.lt.s32.totalorder %s26, 1
        %s794 = scalar_select %p793, %s26, 1
        %s795 = smul.addr %s794, 8
        %s796 = scalar_lea.vmem %s4, %s795
        // Predicated region
        $region61: #{tpu_custom_call.1} parent=31 // pred_check
          %p797 = pneg %p136
        $region62: #{tpu_custom_call.1} parent=31 // pred_check_branch
          %799 = sbr.rel (%p797) target = $region64
        $region63: #{tpu_custom_call.1} parent=31 // pred_region
          _
        $region64: #{tpu_custom_call.1} parent=31 // pred_fallthru
          _
        // Predicated region
        $region65: #{tpu_custom_call.1} parent=31 // pred_check
          %p800 = pneg %p162
        $region66: #{tpu_custom_call.1} parent=31 // pred_check_branch
          %802 = sbr.rel (%p800) target = $region68
        $region67: #{tpu_custom_call.1} parent=31 // pred_region
          _
        $region68: #{tpu_custom_call.1} parent=31 // pred_fallthru
          _
      $region32: #{tpu_custom_call.1} parent=5 // pred_fallthru
        _
      %p803 = scmp.le.s32.totalorder 2, %s17
      // Predicated region
      $region69: #{tpu_custom_call.1} parent=5 // pred_check
        %p804 = pneg %p803
      $region70: #{tpu_custom_call.1} parent=5 // pred_check_branch
        %806 = sbr.rel (%p804) target = $region72
      $region71: #{tpu_custom_call.1} parent=5 // pred_region
        %s807 = ssub.s32 %s17, 2
        // Predicated region
        $region73: #{tpu_custom_call.1} parent=71 // pred_check
          %p808 = pneg %p142
        $region74: #{tpu_custom_call.1} parent=71 // pred_check_branch
          %810 = sbr.rel (%p808) target = $region76
        $region75: #{tpu_custom_call.1} parent=71 // pred_region
          %p811 = scmp.lt.s32.totalorder %s28, 1
          %s812 = scalar_select %p811, %s28, 1
          %s813 = smul.addr %s812, 8
          %s814 = scalar_lea.vmem %s3, %s813
        $region76: #{tpu_custom_call.1} parent=71 // pred_fallthru
          _
        // Predicated region
        $region77: #{tpu_custom_call.1} parent=71 // pred_check
          %p815 = pneg %p168
        $region78: #{tpu_custom_call.1} parent=71 // pred_check_branch
          %817 = sbr.rel (%p815) target = $region80
        $region79: #{tpu_custom_call.1} parent=71 // pred_region
          %p818 = scmp.lt.s32.totalorder %s28, 1
          %s819 = scalar_select %p818, %s28, 1
          %s820 = smul.addr %s819, 8
          %s821 = scalar_lea.vmem %s4, %s820
        $region80: #{tpu_custom_call.1} parent=71 // pred_fallthru
          _
      $region72: #{tpu_custom_call.1} parent=5 // pred_fallthru
        _
    $region6: #{tpu_custom_call.1} parent=1 // loop_footer
      %s21 = sadd.s32 1, %s17
    $region7: #{tpu_custom_call.1} parent=1 // loop_footer_branch
      %16 = sbr.rel target = $region3
    $region8: #{tpu_custom_call.1} parent=1 // loop_exit
      _
    %822 = vsyncpa [#allocation6], 1
    %s823 = scalar_lea.sflag [#allocation6], 1
    %824 = vsyncpa %s823, 1
    %825 = vsyncpa [#allocation8], 1
    %s826 = scalar_lea.sflag [#allocation8], 1
    %827 = vsyncpa %s826, 1

</llo_original>
